<compile_context>
chip_gen: v6e
topology: v6e:2x2x1
jax: 0.10.0
libtpu: 0.0.40
codegen_flags: <defaults>
</compile_context>

<pallas_src>
import functools
import math

import jax
import jax.numpy as jnp
from jax import lax
from jax.experimental import pallas as pl
from jax.experimental.pallas import tpu as pltpu

LANE = 128                   # vreg lane width
TILE_R = 2048                # sublane rows per grid step: 2048x128 f32 = 1 MiB
ACC_R = 64                   # accumulator rows (8 vregs of ILP per accumulator)
MIB = 1 << 20
INV_SQRT_2PI = 1.0 / math.sqrt(2.0 * math.pi)

_ARBITRARY = getattr(pltpu, "ARBITRARY", "arbitrary")
_CORE_PARALLEL = getattr(pltpu, "CORE_PARALLEL", "parallel")


# ----------------------------------------------------------------------------
# Hardware probing (defensive: falls back to safe single-core defaults).
# ----------------------------------------------------------------------------
@functools.lru_cache(maxsize=1)
def _tpu_hw():
    cores, vmem_cap = 1, None
    try:
        info = pltpu.get_tpu_info()
        for a in ("num_cores", "core_count", "num_tensorcores",
                  "tensorcore_count", "num_cores_per_chip"):
            try:
                v = int(getattr(info, a))
            except Exception:
                continue
            if 1 <= v <= 16:
                cores = v
                break
        for a in ("vmem_capacity_bytes", "vmem_size_bytes", "vmem_bytes"):
            try:
                v = int(getattr(info, a))
            except Exception:
                continue
            if v > 0:
                vmem_cap = v
                break
    except Exception:
        pass
    return cores, vmem_cap


def _split(total_blocks, npart_max):
    npart = npart_max if (npart_max > 1 and total_blocks >= 2 * npart_max) else 1
    return npart, pl.cdiv(total_blocks, npart)


def _dim_sem(npart):
    # Only core_parallel-style semantics genuinely shard across TensorCores.
    if npart > 1:
        return (_CORE_PARALLEL, _ARBITRARY)
    return (_ARBITRARY, _ARBITRARY)


def _block_mask(block_idx, shape, tile_r, n_valid):
    rows_i = lax.broadcasted_iota(jnp.int32, shape, 0)
    cols_i = lax.broadcasted_iota(jnp.int32, shape, 1)
    flat = (block_idx * tile_r + rows_i) * LANE + cols_i
    return flat < n_valid


# ----------------------------------------------------------------------------
# Fused streaming kernel: one HBM read.  Blocks are DMA'd in (pipelined by the
# BlockSpec machinery), stashed into a VMEM slab and sum(x) is accumulated.
# The last grid step computes mean, centered variance and the entropy sum
# entirely from the VMEM-resident copy.
# ----------------------------------------------------------------------------
def _fused_stream_kernel(x_ref, out_ref, slab_ref, acc_ref, *,
                         n_valid, nblk, tile_r, ragged, mu, sigma):
    i = pl.program_id(0)
    groups = tile_r // ACC_R
    need_mean = (mu is None) or (sigma is None)

    @pl.when(i == 0)
    def _():
        acc_ref[...] = jnp.zeros_like(acc_ref)

    x = x_ref[...].astype(jnp.float32)
    off = pl.multiple_of(i * tile_r, tile_r)
    slab_ref[pl.ds(off, tile_r), :] = x          # single-HBM-read residency

    def _sum_rows(v):
        return jnp.sum(v.reshape(groups, ACC_R, LANE), axis=0)

    if need_mean:
        if ragged:
            @pl.when(i < nblk - 1)
            def _():
                acc_ref[...] = acc_ref[...] + _sum_rows(x)

            @pl.when(i == nblk - 1)
            def _():
                xm = jnp.where(_block_mask(i, x.shape, tile_r, n_valid), x, 0.0)
                acc_ref[...] = acc_ref[...] + _sum_rows(xm)
        else:
            acc_ref[...] = acc_ref[...] + _sum_rows(x)

    @pl.when(i == nblk - 1)
    def _():
        n_f = jnp.float32(n_valid)
        if need_mean:
            mean = jnp.sum(acc_ref[...]) / n_f
        mu_v = jnp.float32(mu) if mu is not None else mean

        if sigma is not None:
            sigma_v = jnp.float32(sigma)
        else:
            # Exact centered variance from the VMEM-resident slab.
            def var_body(j, carry):
                jo = pl.multiple_of(j * tile_r, tile_r)
                blk = slab_ref[pl.ds(jo, tile_r), :]
                d = blk - mean
                dd = d * d
                if ragged:
                    dd = jnp.where(_block_mask(j, dd.shape, tile_r, n_valid),
                                   dd, 0.0)
                return carry + _sum_rows(dd)

            ss = jnp.sum(lax.fori_loop(
                0, nblk, var_body, jnp.zeros((ACC_R, LANE), jnp.float32)))
            var = ss / jnp.float32(max(n_valid - 1, 1))
            sigma_v = jnp.sqrt(jnp.maximum(var, 0.0)) + jnp.float32(1e-6)

        inv_sigma = jnp.float32(1.0) / sigma_v

        def ent_body(j, carry):
            jo = pl.multiple_of(j * tile_r, tile_r)
            blk = slab_ref[pl.ds(jo, tile_r), :]
            z = (blk - mu_v) * inv_sigma
            px = jnp.exp(-0.5 * z * z) * jnp.float32(INV_SQRT_2PI)
            val = px * jnp.log(px + jnp.float32(1e-6))
            if ragged:
                val = jnp.where(_block_mask(j, val.shape, tile_r, n_valid),
                                val, 0.0)
            return carry + _sum_rows(val)

        tot = jnp.sum(lax.fori_loop(
            0, nblk, ent_body, jnp.zeros((ACC_R, LANE), jnp.float32)))
        out_ref[...] = jnp.reshape(-(tot / n_f), (1, 1))


# ----------------------------------------------------------------------------
# Tiled pass 1 (very large inputs): pivot-shifted sum / sum-of-squares.
# ----------------------------------------------------------------------------
def _stats_kernel(pivot_ref, x_ref, sum_ref, sumsq_ref, acc_ref, accsq_ref, *,
                  n_valid, total_blocks, spp, tile_r, ragged):
    p = pl.program_id(0)
    i = pl.program_id(1)
    groups = tile_r // ACC_R

    @pl.when(i == 0)
    def _():
        acc_ref[...] = jnp.zeros_like(acc_ref)
        accsq_ref[...] = jnp.zeros_like(accsq_ref)

    d = x_ref[...].astype(jnp.float32) - pivot_ref[0]

    def accumulate(dv):
        dr = dv.reshape(groups, ACC_R, LANE)
        acc_ref[...] = acc_ref[...] + jnp.sum(dr, axis=0)
        accsq_ref[...] = accsq_ref[...] + jnp.sum(dr * dr, axis=0)

    if ragged:
        gb = p * spp + i                       # unclamped global block index

        @pl.when(gb < total_blocks - 1)        # interior blocks: no masking
        def _():
            accumulate(d)

        @pl.when(gb >= total_blocks - 1)       # ragged / overhang blocks only
        def _():
            accumulate(jnp.where(_block_mask(gb, d.shape, tile_r, n_valid),
                                 d, 0.0))
    else:
        accumulate(d)

    @pl.when(i == pl.num_programs(1) - 1)      # one XLU reduce per partition
    def _():
        sum_ref[...] = jnp.reshape(jnp.sum(acc_ref[...]), (1, 1))
        sumsq_ref[...] = jnp.reshape(jnp.sum(accsq_ref[...]), (1, 1))


# ----------------------------------------------------------------------------
# Tiled entropy pass: sum(px*log(px+1e-6)) with fixed mu / 1/sigma.
# ----------------------------------------------------------------------------
def _entropy_kernel(mu_ref, isg_ref, x_ref, out_ref, acc_ref, *,
                    n_valid, total_blocks, spp, tile_r, ragged):
    p = pl.program_id(0)
    i = pl.program_id(1)
    groups = tile_r // ACC_R

    @pl.when(i == 0)
    def _():
        acc_ref[...] = jnp.zeros_like(acc_ref)

    x = x_ref[...].astype(jnp.float32)
    z = (x - mu_ref[0]) * isg_ref[0]
    px = jnp.exp(-0.5 * z * z) * jnp.float32(INV_SQRT_2PI)
    val = px * jnp.log(px + jnp.float32(1e-6))

    def accumulate(v):
        acc_ref[...] = acc_ref[...] + jnp.sum(v.reshape(groups, ACC_R, LANE),
                                              axis=0)

    if ragged:
        gb = p * spp + i

        @pl.when(gb < total_blocks - 1)
        def _():
            accumulate(val)

        @pl.when(gb >= total_blocks - 1)
        def _():
            accumulate(jnp.where(_block_mask(gb, val.shape, tile_r, n_valid),
                                 val, 0.0))
    else:
        accumulate(val)

    @pl.when(i == pl.num_programs(1) - 1)
    def _():
        out_ref[...] = jnp.reshape(jnp.sum(acc_ref[...]), (1, 1))


# ----------------------------------------------------------------------------
# pallas_call wrappers.
# ----------------------------------------------------------------------------
def _run_fused(x2d, n, tile_r, nblk, mu, sigma):
    ragged = (nblk * tile_r * LANE != n)
    slab_rows = nblk * tile_r
    slab_bytes = slab_rows * LANE * 4
    out = pl.pallas_call(
        functools.partial(_fused_stream_kernel, n_valid=n, nblk=nblk,
                          tile_r=tile_r, ragged=ragged, mu=mu, sigma=sigma),
        out_shape=jax.ShapeDtypeStruct((1, 1), jnp.float32),
        grid=(nblk,),
        in_specs=[pl.BlockSpec((tile_r, LANE), lambda i: (i, 0))],
        out_specs=pl.BlockSpec((1, 1), lambda i: (0, 0)),
        scratch_shapes=[pltpu.VMEM((slab_rows, LANE), jnp.float32),
                        pltpu.VMEM((ACC_R, LANE), jnp.float32)],
        compiler_params=pltpu.CompilerParams(
            dimension_semantics=(_ARBITRARY,),
            vmem_limit_bytes=int(slab_bytes + 8 * MIB)),
    )(x2d)
    return out[0, 0]


def _run_stats(x2d, n, pivot, tile_r, total_blocks, npart_max):
    npart, spp = _split(total_blocks, npart_max)
    ragged = (npart * spp * tile_r * LANE != n)
    x_index = lambda p, i, *_: (jnp.minimum(p * spp + i, total_blocks - 1), 0)
    sums, sumsqs = pl.pallas_call(
        functools.partial(_stats_kernel, n_valid=n, total_blocks=total_blocks,
                          spp=spp, tile_r=tile_r, ragged=ragged),
        out_shape=(jax.ShapeDtypeStruct((npart, 1), jnp.float32),
                   jax.ShapeDtypeStruct((npart, 1), jnp.float32)),
        grid_spec=pltpu.PrefetchScalarGridSpec(
            num_scalar_prefetch=1,
            grid=(npart, spp),
            in_specs=[pl.BlockSpec((tile_r, LANE), x_index)],
            out_specs=(pl.BlockSpec((1, 1), lambda p, i, *_: (p, 0)),
                       pl.BlockSpec((1, 1), lambda p, i, *_: (p, 0))),
            scratch_shapes=[pltpu.VMEM((ACC_R, LANE), jnp.float32),
                            pltpu.VMEM((ACC_R, LANE), jnp.float32)]),
        compiler_params=pltpu.CompilerParams(
            dimension_semantics=_dim_sem(npart)),
    )(jnp.asarray(pivot, jnp.float32).reshape(1), x2d)
    return jnp.sum(sums), jnp.sum(sumsqs)


def _run_entropy(x2d, n, mu_v, isg_v, tile_r, total_blocks, npart_max):
    npart, spp = _split(total_blocks, npart_max)
    ragged = (npart * spp * tile_r * LANE != n)
    x_index = lambda p, i, *_: (jnp.minimum(p * spp + i, total_blocks - 1), 0)
    partials = pl.pallas_call(
        functools.partial(_entropy_kernel, n_valid=n, total_blocks=total_blocks,
                          spp=spp, tile_r=tile_r, ragged=ragged),
        out_shape=jax.ShapeDtypeStruct((npart, 1), jnp.float32),
        grid_spec=pltpu.PrefetchScalarGridSpec(
            num_scalar_prefetch=2,
            grid=(npart, spp),
            in_specs=[pl.BlockSpec((tile_r, LANE), x_index)],
            out_specs=pl.BlockSpec((1, 1), lambda p, i, *_: (p, 0)),
            scratch_shapes=[pltpu.VMEM((ACC_R, LANE), jnp.float32)]),
        compiler_params=pltpu.CompilerParams(
            dimension_semantics=_dim_sem(npart)),
    )(jnp.asarray(mu_v, jnp.float32).reshape(1),
      jnp.asarray(isg_v, jnp.float32).reshape(1), x2d)
    return -(jnp.sum(partials) / jnp.float32(n))


# ----------------------------------------------------------------------------
# Public wrapper (EntropyLoss.forward).
# ----------------------------------------------------------------------------
def entropy_loss(x, mu=None, sigma=None, *, fuse_slab_bytes=None,
                 tile_rows=TILE_R):
    """Pallas implementation of EntropyLoss.forward. Returns a scalar f32."""
    flat = jnp.reshape(x, (-1,))              # free for contiguous inputs
    n = int(flat.shape[0])

    n_lanes = pl.cdiv(n, LANE) * LANE
    if n_lanes != n:
        # TODO(synk): a manual-DMA tail path would remove this whole-array pad
        # copy for lane-unaligned inputs; pad stays in the native dtype.
        flat = jnp.pad(flat, (0, n_lanes - n))
    rows = n_lanes // LANE
    x2d = jnp.reshape(flat, (rows, LANE))     # native dtype; kernels cast blocks

    tile_r = max(ACC_R, (int(tile_rows) // ACC_R) * ACC_R)
    tile_r = min(tile_r, pl.cdiv(rows, ACC_R) * ACC_R)
    total_blocks = pl.cdiv(rows, tile_r)

    cores, vmem_cap = _tpu_hw()
    npart_max = max(1, cores)

    # Both stats fixed -> single streaming entropy pass (one HBM read).
    if (mu is not None) and (sigma is not None):
        return _run_entropy(x2d, n, jnp.float32(mu),
                            jnp.float32(1.0) / jnp.float32(sigma),
                            tile_r, total_blocks, npart_max)

    # Stats needed: fused single-read kernel when the VMEM slab fits.
    slab_bytes = total_blocks * tile_r * LANE * 4
    if fuse_slab_bytes is None:
        fuse_slab_bytes = 24 * MIB if (vmem_cap or 0) >= 100 * MIB else 12 * MIB
    if slab_bytes <= fuse_slab_bytes:
        return _run_fused(x2d, n, tile_r, total_blocks, mu, sigma)

    # Very large inputs: two streaming passes with a pivot-shifted variance.
    k = min(n, 4096)
    pivot = jnp.mean(flat[:k].astype(jnp.float32))      # tiny HBM read
    s, ss = _run_stats(x2d, n, pivot, tile_r, total_blocks, npart_max)
    mean = pivot + s / jnp.float32(n)
    mu_v = jnp.float32(mu) if mu is not None else mean
    if sigma is not None:
        sigma_v = jnp.float32(sigma)
    else:
        # Shifted second moment around the pivot (pivot ~ mean -> no
        # catastrophic cancellation, unlike E[x^2]-E[x]^2).
        var = jnp.maximum(ss - s * s / jnp.float32(n), 0.0) \
            / jnp.float32(max(n - 1, 1))
        sigma_v = jnp.sqrt(var) + jnp.float32(1e-6)
    return _run_entropy(x2d, n, mu_v, 1.0 / sigma_v, tile_r, total_blocks,
                        npart_max)


# ----------------------------------------------------------------------------
# Pure-JAX reference for verification.
# ----------------------------------------------------------------------------
def _entropy_loss_ref(x, mu=None, sigma=None):
    x = x.astype(jnp.float32)
    mu_v = jnp.float32(mu) if mu is not None else jnp.mean(x)
    if sigma is not None:
        sigma_v = jnp.float32(sigma)
    else:
        sigma_v = jnp.std(x, ddof=1) + 1e-6
    px = jnp.exp(-0.5 * ((x - mu_v) / sigma_v) ** 2) / math.sqrt(2 * math.pi)
    return -jnp.mean(px * jnp.log(px + 1e-6))


if __name__ == "__main__":
    key = jax.random.PRNGKey(0)
    k1, k2, k3 = jax.random.split(key, 3)

    # 1) Small NCHW input, stats computed in-kernel -> fused streaming path.
    x1 = jax.random.normal(k1, (2, 4, 16, 16), dtype=jnp.float32)
    out = jax.block_until_ready(entropy_loss(x1))
    ref = _entropy_loss_ref(x1)
    assert jnp.allclose(out, ref, rtol=2e-5, atol=1e-6), (out, ref)

    # 2) Both mu & sigma fixed -> single streaming entropy pass.
    out = jax.block_until_ready(entropy_loss(x1, mu=0.25, sigma=1.5))
    ref = _entropy_loss_ref(x1, mu=0.25, sigma=1.5)
    assert jnp.allclose(out, ref, rtol=2e-5, atol=1e-6), (out, ref)

    # 3) Fixed mu, computed sigma -> fused-path branch.
    out = jax.block_until_ready(entropy_loss(x1, mu=0.3))
    ref = _entropy_loss_ref(x1, mu=0.3)
    assert jnp.allclose(out, ref, rtol=2e-5, atol=1e-6), (out, ref)

    # 4) Non-lane-aligned size -> lane pad + in-kernel masking (fused path).
    x2 = jax.random.normal(k2, (3, 5, 7, 11), dtype=jnp.float32) * 0.7 + 0.3
    out = jax.block_until_ready(entropy_loss(x2))
    ref = _entropy_loss_ref(x2)
    assert jnp.allclose(out, ref, rtol=2e-5, atol=1e-6), (out, ref)

    # 5) bf16 input streamed in its native dtype (no wrapper astype copy).
    xb = x1.astype(jnp.bfloat16)
    out = jax.block_until_ready(entropy_loss(xb))
    ref = _entropy_loss_ref(xb)
    assert jnp.allclose(out, ref, rtol=2e-5, atol=1e-6), (out, ref)

    # 6) Force the tiled two-pass path (multi-block grid, ragged last block).
    x3 = jax.random.normal(k3, (1, 2, 240, 293), dtype=jnp.float32)
    out = jax.block_until_ready(entropy_loss(x3, fuse_slab_bytes=0,
                                             tile_rows=256))
    ref = _entropy_loss_ref(x3)
    assert jnp.allclose(out, ref, rtol=2e-5, atol=1e-6), (out, ref)

    # 7) Fixed stats on the tiled entropy-only path (masked boundary block).
    out = jax.block_until_ready(entropy_loss(x3, mu=0.1, sigma=1.2,
                                             tile_rows=256))
    ref = _entropy_loss_ref(x3, mu=0.1, sigma=1.2)
    assert jnp.allclose(out, ref, rtol=2e-5, atol=1e-6), (out, ref)

    # 8) Large-|mean| input: pivot-shifted variance stays accurate where the
    #    old uncentered E[x^2]-E[x]^2 formulation would lose ~3 digits.
    out = jax.block_until_ready(entropy_loss(x3 + 100.0, fuse_slab_bytes=0,
                                             tile_rows=256))
    ref = _entropy_loss_ref(x3 + 100.0)
    assert jnp.allclose(out, ref, rtol=1e-4, atol=1e-6), (out, ref)

    print("KERNEL_OK")
</pallas_src>

<mosaic_0001>
module attributes {stable_mosaic.version = 11 : i64} {
  func.func @_fused_stream_kernel(%arg0: i32, %arg1: memref<64x128xf32, #tpu.memory_space<vmem>>, %arg2: memref<1x1xf32, #tpu.memory_space<vmem>>, %arg3: memref<64x128xf32, #tpu.memory_space<vmem>>, %arg4: memref<64x128xf32, #tpu.memory_space<vmem>>) attributes {dimension_semantics = [#tpu.dimension_semantics<arbitrary>], iteration_bounds = array<i64: 1>, scalar_prefetch = 0 : i64, scratch_operands = 2 : i64, tpu.core_type = #tpu.core_type<tc>, window_params = [{transform_indices = @transform_0, window_bounds = array<i64: 64, 128>}, {pipeline_mode = #tpu.pipeline_mode<synchronous>, transform_indices = @transform_1, window_bounds = array<i64: 1, 1>}]} {
    %c0_i32 = arith.constant 0 : i32
    %0 = arith.cmpi eq, %arg0, %c0_i32 : i32
    %1 = arith.extui %0 : i1 to i32
    %c0_i32_0 = arith.constant 0 : i32
    %2 = arith.cmpi ne, %1, %c0_i32_0 : i32
    scf.if %2 {
      %cst = arith.constant 0.000000e+00 : f32
      %17 = vector.broadcast %cst : f32 to vector<64x128xf32>
      %c0_9 = arith.constant 0 : index
      %c0_10 = arith.constant 0 : index
      %18 = vector.load %arg4[%c0_9, %c0_10] : memref<64x128xf32, #tpu.memory_space<vmem>>, vector<64x128xf32>
      tpu.vector_store %arg4[%c0_9, %c0_10], %17 {strides = array<i32>} : memref<64x128xf32, #tpu.memory_space<vmem>>, vector<64x128xf32>,
    } else {
    }
    %c0 = arith.constant 0 : index
    %c0_1 = arith.constant 0 : index
    %3 = vector.load %arg1[%c0, %c0_1] : memref<64x128xf32, #tpu.memory_space<vmem>>, vector<64x128xf32>
    %c64_i32 = arith.constant 64 : i32
    %4 = arith.muli %arg0, %c64_i32 : i32
    %5 = tpu.assume_multiple %4, 64 : i32
    %6 = arith.index_cast %5 : i32 to index
    %c0_2 = arith.constant 0 : index
    %7 = vector.load %arg3[%6, %c0_2] : memref<64x128xf32, #tpu.memory_space<vmem>>, vector<64x128xf32>
    tpu.vector_store %arg3[%6, %c0_2], %3 {strides = array<i32>} : memref<64x128xf32, #tpu.memory_space<vmem>>, vector<64x128xf32>,
    %c0_i32_3 = arith.constant 0 : i32
    %8 = arith.cmpi slt, %arg0, %c0_i32_3 : i32
    %9 = arith.extui %8 : i1 to i32
    %c0_i32_4 = arith.constant 0 : i32
    %10 = arith.cmpi ne, %9, %c0_i32_4 : i32
    scf.if %10 {
      %c0_9 = arith.constant 0 : index
      %c0_10 = arith.constant 0 : index
      %17 = vector.load %arg4[%c0_9, %c0_10] : memref<64x128xf32, #tpu.memory_space<vmem>>, vector<64x128xf32>
      %18 = vector.shape_cast %3 : vector<64x128xf32> to vector<1x64x128xf32>
      %cst = arith.constant dense<0.000000e+00> : vector<64x128xf32>
      %19 = vector.multi_reduction <add>, %18, %cst [0] : vector<1x64x128xf32> to vector<64x128xf32>
      %20 = arith.addf %17, %19 : vector<64x128xf32>
      %c0_11 = arith.constant 0 : index
      %c0_12 = arith.constant 0 : index
      %21 = vector.load %arg4[%c0_11, %c0_12] : memref<64x128xf32, #tpu.memory_space<vmem>>, vector<64x128xf32>
      tpu.vector_store %arg4[%c0_11, %c0_12], %20 {strides = array<i32>} : memref<64x128xf32, #tpu.memory_space<vmem>>, vector<64x128xf32>,
    } else {
    }
    %c0_i32_5 = arith.constant 0 : i32
    %11 = arith.cmpi eq, %arg0, %c0_i32_5 : i32
    %12 = arith.extui %11 : i1 to i32
    %c0_i32_6 = arith.constant 0 : i32
    %13 = arith.cmpi ne, %12, %c0_i32_6 : i32
    scf.if %13 {
      %17 = tpu.iota {dimensions = array<i32: 0>} : vector<64x128xi32>
      %18 = tpu.iota {dimensions = array<i32: 1>} : vector<64x128xi32>
      %c64_i32_9 = arith.constant 64 : i32
      %19 = arith.muli %arg0, %c64_i32_9 : i32
      %20 = vector.broadcast %19 : i32 to vector<64x128xi32>
      %21 = arith.addi %20, %17 : vector<64x128xi32>
      %c128_i32 = arith.constant 128 : i32
      %22 = vector.broadcast %c128_i32 : i32 to vector<64x128xi32>
      %23 = arith.muli %21, %22 : vector<64x128xi32>
      %24 = arith.addi %23, %18 : vector<64x128xi32>
      %c2048_i32 = arith.constant 2048 : i32
      %25 = vector.broadcast %c2048_i32 : i32 to vector<64x128xi32>
      %26 = arith.cmpi slt, %24, %25 : vector<64x128xi32>
      %cst = arith.constant 0.000000e+00 : f32
      %27 = vector.broadcast %cst : f32 to vector<64x128xf32>
      %28 = arith.select %26, %3, %27 : vector<64x128xi1>, vector<64x128xf32>
      %c0_10 = arith.constant 0 : index
      %c0_11 = arith.constant 0 : index
      %29 = vector.load %arg4[%c0_10, %c0_11] : memref<64x128xf32, #tpu.memory_space<vmem>>, vector<64x128xf32>
      %30 = vector.shape_cast %28 : vector<64x128xf32> to vector<1x64x128xf32>
      %cst_12 = arith.constant dense<0.000000e+00> : vector<64x128xf32>
      %31 = vector.multi_reduction <add>, %30, %cst_12 [0] : vector<1x64x128xf32> to vector<64x128xf32>
      %32 = arith.addf %29, %31 : vector<64x128xf32>
      %c0_13 = arith.constant 0 : index
      %c0_14 = arith.constant 0 : index
      %33 = vector.load %arg4[%c0_13, %c0_14] : memref<64x128xf32, #tpu.memory_space<vmem>>, vector<64x128xf32>
      tpu.vector_store %arg4[%c0_13, %c0_14], %32 {strides = array<i32>} : memref<64x128xf32, #tpu.memory_space<vmem>>, vector<64x128xf32>,
    } else {
    }
    %c0_i32_7 = arith.constant 0 : i32
    %14 = arith.cmpi eq, %arg0, %c0_i32_7 : i32
    %15 = arith.extui %14 : i1 to i32
    %c0_i32_8 = arith.constant 0 : i32
    %16 = arith.cmpi ne, %15, %c0_i32_8 : i32
    scf.if %16 {
      %c0_9 = arith.constant 0 : index
      %c0_10 = arith.constant 0 : index
      %17 = vector.load %arg4[%c0_9, %c0_10] : memref<64x128xf32, #tpu.memory_space<vmem>>, vector<64x128xf32>
      %18 = vector.shape_cast %17 : vector<64x128xf32> to vector<1x64x128xf32>
      %cst = arith.constant dense<0.000000e+00> : vector<1xf32>
      %19 = vector.multi_reduction <add>, %18, %cst [1, 2] : vector<1x64x128xf32> to vector<1xf32>
      %20 = vector.shape_cast %19 : vector<1xf32> to vector<1x1x1xf32>
      %21 = vector.extract %20[0, 0, 0] : f32 from vector<1x1x1xf32>
      %cst_11 = arith.constant 2.048000e+03 : f32
      %22 = arith.divf %21, %cst_11 : f32
      %cst_12 = arith.constant 0.000000e+00 : f32
      %23 = vector.broadcast %cst_12 : f32 to vector<64x128xf32>
      %c0_i32_13 = arith.constant 0 : i32
      %c64_i32_14 = arith.constant 64 : i32
      %24 = arith.muli %c0_i32_13, %c64_i32_14 : i32
      %25 = tpu.assume_multiple %24, 64 : i32
      %26 = arith.index_cast %25 : i32 to index
      %c0_15 = arith.constant 0 : index
      %27 = vector.load %arg3[%26, %c0_15] : memref<64x128xf32, #tpu.memory_space<vmem>>, vector<64x128xf32>
      %28 = vector.broadcast %22 : f32 to vector<64x128xf32>
      %29 = arith.subf %27, %28 : vector<64x128xf32>
      %30 = arith.mulf %29, %29 : vector<64x128xf32>
      %31 = tpu.iota {dimensions = array<i32: 0>} : vector<64x128xi32>
      %32 = tpu.iota {dimensions = array<i32: 1>} : vector<64x128xi32>
      %c64_i32_16 = arith.constant 64 : i32
      %33 = arith.muli %c0_i32_13, %c64_i32_16 : i32
      %34 = vector.broadcast %33 : i32 to vector<64x128xi32>
      %35 = arith.addi %34, %31 : vector<64x128xi32>
      %c128_i32 = arith.constant 128 : i32
      %36 = vector.broadcast %c128_i32 : i32 to vector<64x128xi32>
      %37 = arith.muli %35, %36 : vector<64x128xi32>
      %38 = arith.addi %37, %32 : vector<64x128xi32>
      %c2048_i32 = arith.constant 2048 : i32
      %39 = vector.broadcast %c2048_i32 : i32 to vector<64x128xi32>
      %40 = arith.cmpi slt, %38, %39 : vector<64x128xi32>
      %cst_17 = arith.constant 0.000000e+00 : f32
      %41 = vector.broadcast %cst_17 : f32 to vector<64x128xf32>
      %42 = arith.select %40, %30, %41 : vector<64x128xi1>, vector<64x128xf32>
      %43 = vector.shape_cast %42 : vector<64x128xf32> to vector<1x64x128xf32>
      %cst_18 = arith.constant dense<0.000000e+00> : vector<64x128xf32>
      %44 = vector.multi_reduction <add>, %43, %cst_18 [0] : vector<1x64x128xf32> to vector<64x128xf32>
      %45 = arith.addf %23, %44 : vector<64x128xf32>
      %c1_i32 = arith.constant 1 : i32
      %46 = vector.shape_cast %45 : vector<64x128xf32> to vector<1x64x128xf32>
      %cst_19 = arith.constant dense<0.000000e+00> : vector<1xf32>
      %47 = vector.multi_reduction <add>, %46, %cst_19 [1, 2] : vector<1x64x128xf32> to vector<1xf32>
      %48 = vector.shape_cast %47 : vector<1xf32> to vector<1x1x1xf32>
      %49 = vector.extract %48[0, 0, 0] : f32 from vector<1x1x1xf32>
      %cst_20 = arith.constant 2.047000e+03 : f32
      %50 = arith.divf %49, %cst_20 : f32
      %cst_21 = arith.constant 0.000000e+00 : f32
      %51 = arith.maximumf %50, %cst_21 : f32
      %52 = math.sqrt %51 : f32
      %cst_22 = arith.constant 9.99999997E-7 : f32
      %53 = arith.addf %52, %cst_22 : f32
      %cst_23 = arith.constant 1.000000e+00 : f32
      %54 = arith.divf %cst_23, %53 : f32
      %cst_24 = arith.constant 0.000000e+00 : f32
      %55 = vector.broadcast %cst_24 : f32 to vector<64x128xf32>
      %c0_i32_25 = arith.constant 0 : i32
      %c64_i32_26 = arith.constant 64 : i32
      %56 = arith.muli %c0_i32_25, %c64_i32_26 : i32
      %57 = tpu.assume_multiple %56, 64 : i32
      %58 = arith.index_cast %57 : i32 to index
      %c0_27 = arith.constant 0 : index
      %59 = vector.load %arg3[%58, %c0_27] : memref<64x128xf32, #tpu.memory_space<vmem>>, vector<64x128xf32>
      %60 = vector.broadcast %22 : f32 to vector<64x128xf32>
      %61 = arith.subf %59, %60 : vector<64x128xf32>
      %62 = vector.broadcast %54 : f32 to vector<64x128xf32>
      %63 = arith.mulf %61, %62 : vector<64x128xf32>
      %cst_28 = arith.constant -5.000000e-01 : f32
      %64 = vector.broadcast %cst_28 : f32 to vector<64x128xf32>
      %65 = arith.mulf %64, %63 : vector<64x128xf32>
      %66 = arith.mulf %65, %63 : vector<64x128xf32>
      %67 = math.exp %66 : vector<64x128xf32>
      %cst_29 = arith.constant 0.398942292 : f32
      %68 = vector.broadcast %cst_29 : f32 to vector<64x128xf32>
      %69 = arith.mulf %67, %68 : vector<64x128xf32>
      %cst_30 = arith.constant 9.99999997E-7 : f32
      %70 = vector.broadcast %cst_30 : f32 to vector<64x128xf32>
      %71 = arith.addf %69, %70 : vector<64x128xf32>
      %72 = math.log %71 : vector<64x128xf32>
      %73 = arith.mulf %69, %72 : vector<64x128xf32>
      %74 = tpu.iota {dimensions = array<i32: 0>} : vector<64x128xi32>
      %75 = tpu.iota {dimensions = array<i32: 1>} : vector<64x128xi32>
      %c64_i32_31 = arith.constant 64 : i32
      %76 = arith.muli %c0_i32_25, %c64_i32_31 : i32
      %77 = vector.broadcast %76 : i32 to vector<64x128xi32>
      %78 = arith.addi %77, %74 : vector<64x128xi32>
      %c128_i32_32 = arith.constant 128 : i32
      %79 = vector.broadcast %c128_i32_32 : i32 to vector<64x128xi32>
      %80 = arith.muli %78, %79 : vector<64x128xi32>
      %81 = arith.addi %80, %75 : vector<64x128xi32>
      %c2048_i32_33 = arith.constant 2048 : i32
      %82 = vector.broadcast %c2048_i32_33 : i32 to vector<64x128xi32>
      %83 = arith.cmpi slt, %81, %82 : vector<64x128xi32>
      %cst_34 = arith.constant 0.000000e+00 : f32
      %84 = vector.broadcast %cst_34 : f32 to vector<64x128xf32>
      %85 = arith.select %83, %73, %84 : vector<64x128xi1>, vector<64x128xf32>
      %86 = vector.shape_cast %85 : vector<64x128xf32> to vector<1x64x128xf32>
      %cst_35 = arith.constant dense<0.000000e+00> : vector<64x128xf32>
      %87 = vector.multi_reduction <add>, %86, %cst_35 [0] : vector<1x64x128xf32> to vector<64x128xf32>
      %88 = arith.addf %55, %87 : vector<64x128xf32>
      %c1_i32_36 = arith.constant 1 : i32
      %89 = vector.shape_cast %88 : vector<64x128xf32> to vector<1x64x128xf32>
      %cst_37 = arith.constant dense<0.000000e+00> : vector<1xf32>
      %90 = vector.multi_reduction <add>, %89, %cst_37 [1, 2] : vector<1x64x128xf32> to vector<1xf32>
      %91 = vector.shape_cast %90 : vector<1xf32> to vector<1x1x1xf32>
      %92 = vector.extract %91[0, 0, 0] : f32 from vector<1x1x1xf32>
      %cst_38 = arith.constant 2.048000e+03 : f32
      %93 = arith.divf %92, %cst_38 : f32
      %cst_39 = arith.constant 0.000000e+00 : f32
      %94 = arith.subf %cst_39, %93 : f32
      %95 = vector.broadcast %94 : f32 to vector<1x1xf32>
      %c0_40 = arith.constant 0 : index
      %c0_41 = arith.constant 0 : index
      %96 = vector.load %arg2[%c0_40, %c0_41] : memref<1x1xf32, #tpu.memory_space<vmem>>, vector<1x1xf32>
      tpu.vector_store %arg2[%c0_40, %c0_41], %95 {strides = array<i32>} : memref<1x1xf32, #tpu.memory_space<vmem>>, vector<1x1xf32>,
    } else {
    }
    return
  }
  func.func @transform_0(%arg0: i32) -> (i32, i32) {
    %c0_i32 = arith.constant 0 : i32
    %c0_i32_0 = arith.constant 0 : i32
    return %arg0, %c0_i32 : i32, i32
  }
  func.func @transform_1(%arg0: i32) -> (i32, i32) {
    %c0_i32 = arith.constant 0 : i32
    %c0_i32_0 = arith.constant 0 : i32
    %c0_i32_1 = arith.constant 0 : i32
    return %c0_i32, %c0_i32_0 : i32, i32
  }
}

</mosaic_0001>

<llo_original>
// kernel: tpu_custom_call.1
$region0: #{tpu_custom_call.1}
  #allocation0 [shape = 'u32[]', space=smem, size = 0x4, offset = 0x4, fixed_abs, tag = 'smem constant byte address 0x4 - core index']
  #allocation1 [shape = 'u32[144,128]{1,0:T(1,128)}', space=vmem, size = 0x12000, scoped, tag = 'internal scratch']
  #allocation2 [shape = 'f32[64,128]{1,0:T(8,128)}', space=vmem, size = 0x8000, scoped, tag = 'scratch operand']
  #allocation3 [shape = 'f32[64,128]{1,0:T(8,128)}', space=vmem, size = 0x8000, scoped, tag = 'scratch operand']
  %s0 = inlined_call_operand.hbm [shape: f32[16,128], index: 0, kind: input, shape index: {}]
  %s1 = inlined_call_operand.hbm [shape: f32[1,1], index: 1, kind: output, shape index: {}]
  %s2 = sld [smem:[#allocation0]]
  $region30: #{tpu_custom_call.1} parent=0
    _
  %s4 = ssub.s32 1, %s2
  %s5 = scalar_select 0, %s4, %s2
  $region1: #{tpu_custom_call.1} parent=0
    #allocation4 [shape = 'u8[32768]{0}', space=vmem, size = 0x8000, scoped, tag = 'input window, operand 0, single buffered']
    #allocation5 [shape = 's32[1]{0}', space=sflag, size = 0x4, scoped, tag = 'scoped memory for tpu_custom_call.1']
    #allocation6 [shape = 's32[1]{0}', space=sflag, size = 0x4, scoped, tag = 'scoped memory for tpu_custom_call.1']
    #allocation7 [shape = 'u8[512]{0}', space=vmem, size = 0x400, scoped, tag = 'output window, operand 0, single buffered']
    %6 = vsyncpa [#allocation5], 0
    %7 = vsyncpa [#allocation6], 0
    // Predicated region
    $region2: #{tpu_custom_call.1} parent=1 // pred_check
      _
    $region3: #{tpu_custom_call.1} parent=1 // pred_check_branch
      %9 = sbr.rel (0) target = $region5
    $region4: #{tpu_custom_call.1} parent=1 // pred_region
      %s11 = ssub.s32 1024, 256
      %12 = vsyncadd [#allocation5], %s11
      %s13 = sshll.u32 [#allocation4], 4
      %s14 = int_to_ptr.vmem [resolvable:$true] %s13
      %19 = dma.hbm_to_vmem [thread:$0]  %s0, 256, %s14, [#allocation5], 128, 128, 8
    $region5: #{tpu_custom_call.1} parent=1 // pred_fallthru
      _
    // Predicated region
    $region6: #{tpu_custom_call.1} parent=1 // pred_check
      _
    $region7: #{tpu_custom_call.1} parent=1 // pred_check_branch
      %21 = sbr.rel (0) target = $region9
    $region8: #{tpu_custom_call.1} parent=1 // pred_region
      %22 = dma.done [#allocation5], 1024
    $region9: #{tpu_custom_call.1} parent=1 // pred_fallthru
      _
    %p23 = scmp.eq.s32.totalorder 0, 0
    // Predicated region
    $region10: #{tpu_custom_call.1} parent=1 // pred_check
      %p24 = pneg %p23
    $region11: #{tpu_custom_call.1} parent=1 // pred_check_branch
      %26 = sbr.rel (%p24) target = $region13
    $region12: #{tpu_custom_call.1} parent=1 // pred_region
      %27 = vst [vmem:[#allocation3] sm:$0xff] 0.0
      %28 = vst [vmem:[#allocation3 + $0x8] sm:$0xff] 0.0
      %29 = vst [vmem:[#allocation3 + $0x10] sm:$0xff] 0.0
      %30 = vst [vmem:[#allocation3 + $0x18] sm:$0xff] 0.0
      %31 = vst [vmem:[#allocation3 + $0x20] sm:$0xff] 0.0
      %32 = vst [vmem:[#allocation3 + $0x28] sm:$0xff] 0.0
      %33 = vst [vmem:[#allocation3 + $0x30] sm:$0xff] 0.0
      %34 = vst [vmem:[#allocation3 + $0x38] sm:$0xff] 0.0
    $region13: #{tpu_custom_call.1} parent=1 // pred_fallthru
      _
    %v35 = vld [vmem:[#allocation4] sm:$0xff]
    %v36 = vld [vmem:[#allocation4 + $0x8] sm:$0xff]
    %v37 = vld [vmem:[#allocation4 + $0x10] sm:$0xff]
    %v38 = vld [vmem:[#allocation4 + $0x18] sm:$0xff]
    %v39 = vld [vmem:[#allocation4 + $0x20] sm:$0xff]
    %v40 = vld [vmem:[#allocation4 + $0x28] sm:$0xff]
    %v41 = vld [vmem:[#allocation4 + $0x30] sm:$0xff]
    %v42 = vld [vmem:[#allocation4 + $0x38] sm:$0xff]
    %s43 = smul.u32 0, 64
    %s44 = scalar_lea.vmem [#allocation2], %s43
    %45 = vst [vmem:[%s44] sm:$0xff] %v35
    %46 = vst [vmem:[%s44 + $0x8] sm:$0xff] %v36
    %47 = vst [vmem:[%s44 + $0x10] sm:$0xff] %v37
    %48 = vst [vmem:[%s44 + $0x18] sm:$0xff] %v38
    %49 = vst [vmem:[%s44 + $0x20] sm:$0xff] %v39
    %50 = vst [vmem:[%s44 + $0x28] sm:$0xff] %v40
    %51 = vst [vmem:[%s44 + $0x30] sm:$0xff] %v41
    %52 = vst [vmem:[%s44 + $0x38] sm:$0xff] %v42
    %p53 = scmp.lt.s32.totalorder 0, 0
    // Predicated region
    $region14: #{tpu_custom_call.1} parent=1 // pred_check
      %p54 = pneg %p53
    $region15: #{tpu_custom_call.1} parent=1 // pred_check_branch
      %56 = sbr.rel (%p54) target = $region17
    $region16: #{tpu_custom_call.1} parent=1 // pred_region
      %v57 = vld [vmem:[#allocation3] sm:$0xff]
      %v58 = vld [vmem:[#allocation3 + $0x8] sm:$0xff]
      %v59 = vld [vmem:[#allocation3 + $0x10] sm:$0xff]
      %v60 = vld [vmem:[#allocation3 + $0x18] sm:$0xff]
      %v61 = vld [vmem:[#allocation3 + $0x20] sm:$0xff]
      %v62 = vld [vmem:[#allocation3 + $0x28] sm:$0xff]
      %v63 = vld [vmem:[#allocation3 + $0x30] sm:$0xff]
      %v64 = vld [vmem:[#allocation3 + $0x38] sm:$0xff]
      %v65 = vadd.f32 %v35, 0.0
      %v66 = vadd.f32 %v36, 0.0
      %v67 = vadd.f32 %v37, 0.0
      %v68 = vadd.f32 %v38, 0.0
      %v69 = vadd.f32 %v39, 0.0
      %v70 = vadd.f32 %v40, 0.0
      %v71 = vadd.f32 %v41, 0.0
      %v72 = vadd.f32 %v42, 0.0
      %v73 = vadd.f32 %v57, %v65
      %v74 = vadd.f32 %v58, %v66
      %v75 = vadd.f32 %v59, %v67
      %v76 = vadd.f32 %v60, %v68
      %v77 = vadd.f32 %v61, %v69
      %v78 = vadd.f32 %v62, %v70
      %v79 = vadd.f32 %v63, %v71
      %v80 = vadd.f32 %v64, %v72
      %81 = vst [vmem:[#allocation3] sm:$0xff] %v73
      %82 = vst [vmem:[#allocation3 + $0x8] sm:$0xff] %v74
      %83 = vst [vmem:[#allocation3 + $0x10] sm:$0xff] %v75
      %84 = vst [vmem:[#allocation3 + $0x18] sm:$0xff] %v76
      %85 = vst [vmem:[#allocation3 + $0x20] sm:$0xff] %v77
      %86 = vst [vmem:[#allocation3 + $0x28] sm:$0xff] %v78
      %87 = vst [vmem:[#allocation3 + $0x30] sm:$0xff] %v79
      %88 = vst [vmem:[#allocation3 + $0x38] sm:$0xff] %v80
    $region17: #{tpu_custom_call.1} parent=1 // pred_fallthru
      _
    // Predicated region
    $region18: #{tpu_custom_call.1} parent=1 // pred_check
      %p89 = pneg %p23
    $region19: #{tpu_custom_call.1} parent=1 // pred_check_branch
      %91 = sbr.rel (%p89) target = $region21
    $region20: #{tpu_custom_call.1} parent=1 // pred_region
      %v92 = vlaneseq
      %v93 = vshrl.u32 %v92, 7
      %v94 = vadd.s32 %v93, 8
      %v95 = vadd.s32 %v93, 16
      %v96 = vadd.s32 %v93, 24
      %v97 = vadd.s32 %v93, 32
      %v98 = vadd.s32 %v93, 40
      %v99 = vadd.s32 %v93, 48
      %v100 = vadd.s32 %v93, 56
      %v101 = vlaneseq
      %v102 = vand.u32 %v101, 127
      %v103 = vstv %s43
      %v104 = vadd.s32 %v103, %v93
      %v105 = vadd.s32 %v103, %v94
      %v106 = vadd.s32 %v103, %v95
      %v107 = vadd.s32 %v103, %v96
      %v108 = vadd.s32 %v103, %v97
      %v109 = vadd.s32 %v103, %v98
      %v110 = vadd.s32 %v103, %v99
      %v111 = vadd.s32 %v103, %v100
      %v112 = vmul.u32 %v104, 128
      %v113 = vmul.u32 %v105, 128
      %v114 = vmul.u32 %v106, 128
      %v115 = vmul.u32 %v107, 128
      %v116 = vmul.u32 %v108, 128
      %v117 = vmul.u32 %v109, 128
      %v118 = vmul.u32 %v110, 128
      %v119 = vmul.u32 %v111, 128
      %v120 = vadd.s32 %v112, %v102
      %v121 = vadd.s32 %v113, %v102
      %v122 = vadd.s32 %v114, %v102
      %v123 = vadd.s32 %v115, %v102
      %v124 = vadd.s32 %v116, %v102
      %v125 = vadd.s32 %v117, %v102
      %v126 = vadd.s32 %v118, %v102
      %v127 = vadd.s32 %v119, %v102
      %vm128 = vcmp.lt.s32.totalorder %v120, 2048
      %vm129 = vcmp.lt.s32.totalorder %v121, 2048
      %vm130 = vcmp.lt.s32.totalorder %v122, 2048
      %vm131 = vcmp.lt.s32.totalorder %v123, 2048
      %vm132 = vcmp.lt.s32.totalorder %v124, 2048
      %vm133 = vcmp.lt.s32.totalorder %v125, 2048
      %vm134 = vcmp.lt.s32.totalorder %v126, 2048
      %vm135 = vcmp.lt.s32.totalorder %v127, 2048
      %v136 = vsel %vm128, %v35, 0.0
      %v137 = vsel %vm129, %v36, 0.0
      %v138 = vsel %vm130, %v37, 0.0
      %v139 = vsel %vm131, %v38, 0.0
      %v140 = vsel %vm132, %v39, 0.0
      %v141 = vsel %vm133, %v40, 0.0
      %v142 = vsel %vm134, %v41, 0.0
      %v143 = vsel %vm135, %v42, 0.0
      %v144 = vld [vmem:[#allocation3] sm:$0xff]
      %v145 = vld [vmem:[#allocation3 + $0x8] sm:$0xff]
      %v146 = vld [vmem:[#allocation3 + $0x10] sm:$0xff]
      %v147 = vld [vmem:[#allocation3 + $0x18] sm:$0xff]
      %v148 = vld [vmem:[#allocation3 + $0x20] sm:$0xff]
      %v149 = vld [vmem:[#allocation3 + $0x28] sm:$0xff]
      %v150 = vld [vmem:[#allocation3 + $0x30] sm:$0xff]
      %v151 = vld [vmem:[#allocation3 + $0x38] sm:$0xff]
      %v152 = vadd.f32 %v136, 0.0
      %v153 = vadd.f32 %v137, 0.0
      %v154 = vadd.f32 %v138, 0.0
      %v155 = vadd.f32 %v139, 0.0
      %v156 = vadd.f32 %v140, 0.0
      %v157 = vadd.f32 %v141, 0.0
      %v158 = vadd.f32 %v142, 0.0
      %v159 = vadd.f32 %v143, 0.0
      %v160 = vadd.f32 %v144, %v152
      %v161 = vadd.f32 %v145, %v153
      %v162 = vadd.f32 %v146, %v154
      %v163 = vadd.f32 %v147, %v155
      %v164 = vadd.f32 %v148, %v156
      %v165 = vadd.f32 %v149, %v157
      %v166 = vadd.f32 %v150, %v158
      %v167 = vadd.f32 %v151, %v159
      %168 = vst [vmem:[#allocation3] sm:$0xff] %v160
      %169 = vst [vmem:[#allocation3 + $0x8] sm:$0xff] %v161
      %170 = vst [vmem:[#allocation3 + $0x10] sm:$0xff] %v162
      %171 = vst [vmem:[#allocation3 + $0x18] sm:$0xff] %v163
      %172 = vst [vmem:[#allocation3 + $0x20] sm:$0xff] %v164
      %173 = vst [vmem:[#allocation3 + $0x28] sm:$0xff] %v165
      %174 = vst [vmem:[#allocation3 + $0x30] sm:$0xff] %v166
      %175 = vst [vmem:[#allocation3 + $0x38] sm:$0xff] %v167
      %v176 = vld [vmem:[#allocation3] sm:$0xff]
      %v177 = vld [vmem:[#allocation3 + $0x8] sm:$0xff]
      %v178 = vld [vmem:[#allocation3 + $0x10] sm:$0xff]
      %v179 = vld [vmem:[#allocation3 + $0x18] sm:$0xff]
      %v180 = vld [vmem:[#allocation3 + $0x20] sm:$0xff]
      %v181 = vld [vmem:[#allocation3 + $0x28] sm:$0xff]
      %v182 = vld [vmem:[#allocation3 + $0x30] sm:$0xff]
      %v183 = vld [vmem:[#allocation3 + $0x38] sm:$0xff]
      %v184 = vadd.f32 %v176, %v177
      %v185 = vadd.f32 %v184, %v178
      %v186 = vadd.f32 %v185, %v179
      %v187 = vadd.f32 %v186, %v180
      %v188 = vadd.f32 %v187, %v181
      %v189 = vadd.f32 %v188, %v182
      %v190 = vadd.f32 %v189, %v183
      %191 = vadd.xlane.f32.xlu0 %v190
      %v192 = vpop.xlane.xlu0 %191
      %v193 = vrot.slane %v192, 4
      %v194 = vadd.f32 %v192, %v193
      %v195 = vrot.slane %v194, 2
      %v196 = vadd.f32 %v194, %v195
      %v197 = vrot.slane %v196, 1
      %v198 = vadd.f32 %v196, %v197
      %s199 = vtos %v198
      %v200 = vrcp.pop 2048.0
      %s201 = vtos %v200
      %s202 = smul.f32 %s199, %s201
      %v203 = vld [vmem:[#allocation2] sm:$0xff]
      %v204 = vld [vmem:[#allocation2 + $0x8] sm:$0xff]
      %v205 = vld [vmem:[#allocation2 + $0x10] sm:$0xff]
      %v206 = vld [vmem:[#allocation2 + $0x18] sm:$0xff]
      %v207 = vld [vmem:[#allocation2 + $0x20] sm:$0xff]
      %v208 = vld [vmem:[#allocation2 + $0x28] sm:$0xff]
      %v209 = vld [vmem:[#allocation2 + $0x30] sm:$0xff]
      %v210 = vld [vmem:[#allocation2 + $0x38] sm:$0xff]
      %v211 = vstv %s202
      %v212 = vsub.f32 %v203, %v211
      %v213 = vsub.f32 %v204, %v211
      %v214 = vsub.f32 %v205, %v211
      %v215 = vsub.f32 %v206, %v211
      %v216 = vsub.f32 %v207, %v211
      %v217 = vsub.f32 %v208, %v211
      %v218 = vsub.f32 %v209, %v211
      %v219 = vsub.f32 %v210, %v211
      %v220 = vmul.f32 %v212, %v212
      %v221 = vmul.f32 %v213, %v213
      %v222 = vmul.f32 %v214, %v214
      %v223 = vmul.f32 %v215, %v215
      %v224 = vmul.f32 %v216, %v216
      %v225 = vmul.f32 %v217, %v217
      %v226 = vmul.f32 %v218, %v218
      %v227 = vmul.f32 %v219, %v219
      %v228 = vmul.u32 %v93, 128
      %v229 = vmul.u32 %v94, 128
      %v230 = vmul.u32 %v95, 128
      %v231 = vmul.u32 %v96, 128
      %v232 = vmul.u32 %v97, 128
      %v233 = vmul.u32 %v98, 128
      %v234 = vmul.u32 %v99, 128
      %v235 = vmul.u32 %v100, 128
      %v236 = vadd.s32 %v228, %v102
      %v237 = vadd.s32 %v229, %v102
      %v238 = vadd.s32 %v230, %v102
      %v239 = vadd.s32 %v231, %v102
      %v240 = vadd.s32 %v232, %v102
      %v241 = vadd.s32 %v233, %v102
      %v242 = vadd.s32 %v234, %v102
      %v243 = vadd.s32 %v235, %v102
      %vm244 = vcmp.lt.s32.totalorder %v236, 2048
      %vm245 = vcmp.lt.s32.totalorder %v237, 2048
      %vm246 = vcmp.lt.s32.totalorder %v238, 2048
      %vm247 = vcmp.lt.s32.totalorder %v239, 2048
      %vm248 = vcmp.lt.s32.totalorder %v240, 2048
      %vm249 = vcmp.lt.s32.totalorder %v241, 2048
      %vm250 = vcmp.lt.s32.totalorder %v242, 2048
      %vm251 = vcmp.lt.s32.totalorder %v243, 2048
      %v252 = vsel %vm244, %v220, 0.0
      %v253 = vsel %vm245, %v221, 0.0
      %v254 = vsel %vm246, %v222, 0.0
      %v255 = vsel %vm247, %v223, 0.0
      %v256 = vsel %vm248, %v224, 0.0
      %v257 = vsel %vm249, %v225, 0.0
      %v258 = vsel %vm250, %v226, 0.0
      %v259 = vsel %vm251, %v227, 0.0
      %v260 = vadd.f32 %v252, 0.0
      %v261 = vadd.f32 %v253, 0.0
      %v262 = vadd.f32 %v254, 0.0
      %v263 = vadd.f32 %v255, 0.0
      %v264 = vadd.f32 %v256, 0.0
      %v265 = vadd.f32 %v257, 0.0
      %v266 = vadd.f32 %v258, 0.0
      %v267 = vadd.f32 %v259, 0.0
      %v268 = vadd.f32 %v260, 0.0
      %v269 = vadd.f32 %v261, 0.0
      %v270 = vadd.f32 %v262, 0.0
      %v271 = vadd.f32 %v263, 0.0
      %v272 = vadd.f32 %v264, 0.0
      %v273 = vadd.f32 %v265, 0.0
      %v274 = vadd.f32 %v266, 0.0
      %v275 = vadd.f32 %v267, 0.0
      %v276 = vadd.f32 %v268, %v269
      %v277 = vadd.f32 %v276, %v270
      %v278 = vadd.f32 %v277, %v271
      %v279 = vadd.f32 %v278, %v272
      %v280 = vadd.f32 %v279, %v273
      %v281 = vadd.f32 %v280, %v274
      %v282 = vadd.f32 %v281, %v275
      %283 = vadd.xlane.f32.xlu0 %v282
      %v284 = vpop.xlane.xlu0 %283
      %v285 = vrot.slane %v284, 4
      %v286 = vadd.f32 %v284, %v285
      %v287 = vrot.slane %v286, 2
      %v288 = vadd.f32 %v286, %v287
      %v289 = vrot.slane %v288, 1
      %v290 = vadd.f32 %v288, %v289
      %s291 = vtos %v290
      %v292 = vrcp.pop 2047.0
      %s293 = vtos %v292
      %s294 = smul.f32 %s291, %s293
      %s295 = smax.f32 %s294, 0.0
      %v296 = vstv %s295
      %v297 = vrsqrt.pop %v296
      %v298 = vmul.f32 %v296, %v297
      %vm299 = vcmp.eq.f32.partialorder %v296, inf
      %v300 = vsel %vm299, %v296, %v298
      %vm301 = vcmp.eq.f32.partialorder %v296, 0.0
      %v302 = vand.u32 %v296, 2147483648
      %v303 = vsel %vm301, %v302, %v300
      %s304 = vtos %v303
      %s305 = sadd.f32 %s304, 1e-06
      %v306 = vstv %s305
      %v307 = vrcp.pop %v306
      %s308 = vtos %v307
      %v309 = vstv %s308
      %v310 = vmul.f32 %v212, %v309
      %v311 = vmul.f32 %v213, %v309
      %v312 = vmul.f32 %v214, %v309
      %v313 = vmul.f32 %v215, %v309
      %v314 = vmul.f32 %v216, %v309
      %v315 = vmul.f32 %v217, %v309
      %v316 = vmul.f32 %v218, %v309
      %v317 = vmul.f32 %v219, %v309
      %v318 = vmul.f32 %v310, -0.5
      %v319 = vmul.f32 %v311, -0.5
      %v320 = vmul.f32 %v312, -0.5
      %v321 = vmul.f32 %v313, -0.5
      %v322 = vmul.f32 %v314, -0.5
      %v323 = vmul.f32 %v315, -0.5
      %v324 = vmul.f32 %v316, -0.5
      %v325 = vmul.f32 %v317, -0.5
      %v326 = vmul.f32 %v318, %v310
      %v327 = vmul.f32 %v319, %v311
      %v328 = vmul.f32 %v320, %v312
      %v329 = vmul.f32 %v321, %v313
      %v330 = vmul.f32 %v322, %v314
      %v331 = vmul.f32 %v323, %v315
      %v332 = vmul.f32 %v324, %v316
      %v333 = vmul.f32 %v325, %v317
      %v334 = vmul.f32 %v326, 1.442695
      %v335 = vpow.pop %v334
      %v336 = vmul.f32 %v327, 1.442695
      %v337 = vpow.pop %v336
      %v338 = vmul.f32 %v328, 1.442695
      %v339 = vpow.pop %v338
      %v340 = vmul.f32 %v329, 1.442695
      %v341 = vpow.pop %v340
      %v342 = vmul.f32 %v330, 1.442695
      %v343 = vpow.pop %v342
      %v344 = vmul.f32 %v331, 1.442695
      %v345 = vpow.pop %v344
      %v346 = vmul.f32 %v332, 1.442695
      %v347 = vpow.pop %v346
      %v348 = vmul.f32 %v333, 1.442695
      %v349 = vpow.pop %v348
      %v350 = vmul.f32 %v335, 0.3989423
      %v351 = vmul.f32 %v337, 0.3989423
      %v352 = vmul.f32 %v339, 0.3989423
      %v353 = vmul.f32 %v341, 0.3989423
      %v354 = vmul.f32 %v343, 0.3989423
      %v355 = vmul.f32 %v345, 0.3989423
      %v356 = vmul.f32 %v347, 0.3989423
      %v357 = vmul.f32 %v349, 0.3989423
      %v358 = vadd.f32 %v350, 1e-06
      %v359 = vadd.f32 %v351, 1e-06
      %v360 = vadd.f32 %v352, 1e-06
      %v361 = vadd.f32 %v353, 1e-06
      %v362 = vadd.f32 %v354, 1e-06
      %v363 = vadd.f32 %v355, 1e-06
      %v364 = vadd.f32 %v356, 1e-06
      %v365 = vadd.f32 %v357, 1e-06
      %v366 = vlog2.pop %v358
      %v367 = vmul.f32 %v366, 0.6931472
      %v368 = vlog2.pop %v359
      %v369 = vmul.f32 %v368, 0.6931472
      %v370 = vlog2.pop %v360
      %v371 = vmul.f32 %v370, 0.6931472
      %v372 = vlog2.pop %v361
      %v373 = vmul.f32 %v372, 0.6931472
      %v374 = vlog2.pop %v362
      %v375 = vmul.f32 %v374, 0.6931472
      %v376 = vlog2.pop %v363
      %v377 = vmul.f32 %v376, 0.6931472
      %v378 = vlog2.pop %v364
      %v379 = vmul.f32 %v378, 0.6931472
      %v380 = vlog2.pop %v365
      %v381 = vmul.f32 %v380, 0.6931472
      %v382 = vmul.f32 %v350, %v367
      %v383 = vmul.f32 %v351, %v369
      %v384 = vmul.f32 %v352, %v371
      %v385 = vmul.f32 %v353, %v373
      %v386 = vmul.f32 %v354, %v375
      %v387 = vmul.f32 %v355, %v377
      %v388 = vmul.f32 %v356, %v379
      %v389 = vmul.f32 %v357, %v381
      %v390 = vsel %vm244, %v382, 0.0
      %v391 = vsel %vm245, %v383, 0.0
      %v392 = vsel %vm246, %v384, 0.0
      %v393 = vsel %vm247, %v385, 0.0
      %v394 = vsel %vm248, %v386, 0.0
      %v395 = vsel %vm249, %v387, 0.0
      %v396 = vsel %vm250, %v388, 0.0
      %v397 = vsel %vm251, %v389, 0.0
      %v398 = vadd.f32 %v390, 0.0
      %v399 = vadd.f32 %v391, 0.0
      %v400 = vadd.f32 %v392, 0.0
      %v401 = vadd.f32 %v393, 0.0
      %v402 = vadd.f32 %v394, 0.0
      %v403 = vadd.f32 %v395, 0.0
      %v404 = vadd.f32 %v396, 0.0
      %v405 = vadd.f32 %v397, 0.0
      %v406 = vadd.f32 %v398, 0.0
      %v407 = vadd.f32 %v399, 0.0
      %v408 = vadd.f32 %v400, 0.0
      %v409 = vadd.f32 %v401, 0.0
      %v410 = vadd.f32 %v402, 0.0
      %v411 = vadd.f32 %v403, 0.0
      %v412 = vadd.f32 %v404, 0.0
      %v413 = vadd.f32 %v405, 0.0
      %v414 = vadd.f32 %v406, %v407
      %v415 = vadd.f32 %v414, %v408
      %v416 = vadd.f32 %v415, %v409
      %v417 = vadd.f32 %v416, %v410
      %v418 = vadd.f32 %v417, %v411
      %v419 = vadd.f32 %v418, %v412
      %v420 = vadd.f32 %v419, %v413
      %421 = vadd.xlane.f32.xlu0 %v420
      %v422 = vpop.xlane.xlu0 %421
      %v423 = vrot.slane %v422, 4
      %v424 = vadd.f32 %v422, %v423
      %v425 = vrot.slane %v424, 2
      %v426 = vadd.f32 %v424, %v425
      %v427 = vrot.slane %v426, 1
      %v428 = vadd.f32 %v426, %v427
      %s429 = vtos %v428
      %v430 = vrcp.pop 2048.0
      %s431 = vtos %v430
      %s432 = smul.f32 %s429, %s431
      %s433 = ssub.f32 0.0, %s432
      %v434 = vstv %s433
      %vm435 = vcmask 0
      %436 = vst.msk [vmem:[#allocation7] sm:$0x1] %vm435, %v434
    $region21: #{tpu_custom_call.1} parent=1 // pred_fallthru
      _
    // Predicated region
    $region22: #{tpu_custom_call.1} parent=1 // pred_check
      _
    $region23: #{tpu_custom_call.1} parent=1 // pred_check_branch
      %438 = sbr.rel (0) target = $region25
    $region24: #{tpu_custom_call.1} parent=1 // pred_region
      %s440 = ssub.s32 16, 16
      %441 = vsyncadd [#allocation6], %s440
      %s443 = sshll.u32 [#allocation7], 4
      %s444 = int_to_ptr.vmem [resolvable:$true] %s443
      %446 = dma.vmem_to_hbm [thread:$0]  %s444, 16, %s1, [#allocation6]
    $region25: #{tpu_custom_call.1} parent=1 // pred_fallthru
      _
    // Predicated region
    $region26: #{tpu_custom_call.1} parent=1 // pred_check
      _
    $region27: #{tpu_custom_call.1} parent=1 // pred_check_branch
      %448 = sbr.rel (0) target = $region29
    $region28: #{tpu_custom_call.1} parent=1 // pred_region
      %449 = dma.done [#allocation6], 16
    $region29: #{tpu_custom_call.1} parent=1 // pred_fallthru
      _
    %450 = vsyncpa [#allocation5], 1
    %451 = vsyncpa [#allocation6], 1

</llo_original>
